<compile_context>
chip_gen: v7x
topology: tpu7x:2x2x1
jax: 0.10.0
libtpu: 0.0.40
codegen_flags: <defaults>
</compile_context>

<pallas_src>
import functools

import jax
import jax.numpy as jnp
from jax.experimental import pallas as pl
from jax.experimental.pallas import tpu as pltpu

HIDDEN = 32        # logical hidden size of the PyTorch module
HIDDEN_PAD = 128   # hidden padded to a full 128-lane vreg (zero-padded, mathematically inert)
ACTION_PAD = 128   # lane-dense width used only for the in-kernel second matmul


def _policy_kernel(x_ref, p1_ref, p2_ref, out_ref, *, obs, hidden_pad):
    # x_ref  : (TB, obs)                    f32 -- streamed along the batch grid axis
    # p1_ref : (obs + 1, HIDDEN_PAD)        f32 -- rows [0:obs] = W1, row [obs] = b1
    # p2_ref : (hidden_pad + 1, ACTION_PAD) f32 -- rows [0:hidden_pad] = W2, last row = b2
    # out_ref: (TB, action_shape)           f32 -- narrow output (real action width)
    x = x_ref[...]

    # ---- encoder: Linear(obs, 32) + ReLU (hidden zero-padded to 128 lanes) ----
    w1 = p1_ref[0:obs, :]
    b1 = p1_ref[obs:obs + 1, :]
    h = jnp.maximum(jnp.dot(x, w1, preferred_element_type=jnp.float32) + b1, 0.0)

    # ---- head: Linear(32, action) (action zero-padded to 128 lanes for compute) ----
    w2 = p2_ref[0:hidden_pad, :]
    b2 = p2_ref[hidden_pad:hidden_pad + 1, :]
    logit = jnp.dot(h, w2, preferred_element_type=jnp.float32) + b2

    # Narrow store: only the real action columns go back to HBM (masked vst is cheap
    # next to the 16x DMA bytes saved).
    out_ref[...] = logit[:, :out_ref.shape[-1]].astype(out_ref.dtype)


def pack_params(w1, b1, w2, b2):
    """Pack f32 params into two zero-padded f32 slabs: [w1; b1] and [w2; b2]."""
    obs, hidden = w1.shape
    action = w2.shape[1]
    assert hidden == HIDDEN and hidden <= HIDDEN_PAD and action <= ACTION_PAD

    p1 = jnp.zeros((obs + 1, HIDDEN_PAD), jnp.float32)
    p1 = p1.at[:obs, :hidden].set(w1)
    p1 = p1.at[obs, :hidden].set(b1.reshape(-1))

    p2 = jnp.zeros((HIDDEN_PAD + 1, ACTION_PAD), jnp.float32)
    p2 = p2.at[:hidden, :action].set(w2)
    p2 = p2.at[HIDDEN_PAD, :action].set(b2.reshape(-1))
    return p1, p2


def _round_up(n, m):
    return ((n + m - 1) // m) * m


def discrete_policy_network(x, p1, p2, action_shape, *, block_b=4096):
    """x: (B, obs) f32; p1/p2: packed slabs from pack_params. Returns logits (B, action) f32."""
    B, obs = x.shape
    hidden_pad = p2.shape[0] - 1
    assert action_shape <= ACTION_PAD

    # Batch tile: big (amortizes ~0.35 us per grid step), multiple of 8, and capped at
    # ~ceil(B/2) so the grid has >=2 steps whenever B > 8 (v7x megacore actually splits).
    block_b = max(8, (block_b // 8) * 8)
    half = _round_up(pl.cdiv(B, 2), 8)
    TB = max(8, min(block_b, half))
    grid_b = pl.cdiv(B, TB)   # ragged tail: Pallas masks the partial last block

    kernel = functools.partial(_policy_kernel, obs=obs, hidden_pad=hidden_pad)

    flops = 2 * B * (obs * HIDDEN_PAD + hidden_pad * ACTION_PAD)
    bytes_accessed = (B * obs * 4            # x read
                      + p1.size * 4 + p2.size * 4   # resident params (read once)
                      + B * action_shape * 4)       # narrowed output writeback

    out = pl.pallas_call(
        kernel,
        out_shape=jax.ShapeDtypeStruct((B, action_shape), jnp.float32),
        grid=(grid_b,),
        in_specs=[
            pl.BlockSpec((TB, obs), lambda i: (i, 0)),        # x: streamed per batch tile
            pl.BlockSpec(p1.shape, lambda i: (0, 0)),         # [w1; b1]: VMEM-resident
            pl.BlockSpec(p2.shape, lambda i: (0, 0)),         # [w2; b2]: VMEM-resident
        ],
        out_specs=pl.BlockSpec((TB, action_shape), lambda i: (i, 0)),
        compiler_params=pltpu.CompilerParams(
            dimension_semantics=("parallel",)),               # megacore split on v7x
        cost_estimate=pl.CostEstimate(
            flops=flops, transcendentals=0, bytes_accessed=bytes_accessed),
    )(x, p1, p2)

    return out


def init_params(key, obs_shape, action_shape, hidden=HIDDEN):
    """PyTorch nn.Linear-style init; weights stored as (in_features, out_features)."""
    k1, k2, k3, k4 = jax.random.split(key, 4)
    lim1 = 1.0 / jnp.sqrt(obs_shape)
    lim2 = 1.0 / jnp.sqrt(hidden)
    w1 = jax.random.uniform(k1, (obs_shape, hidden), jnp.float32, -lim1, lim1)
    b1 = jax.random.uniform(k2, (hidden,), jnp.float32, -lim1, lim1)
    w2 = jax.random.uniform(k3, (hidden, action_shape), jnp.float32, -lim2, lim2)
    b2 = jax.random.uniform(k4, (action_shape,), jnp.float32, -lim2, lim2)
    return w1, b1, w2, b2


if __name__ == "__main__":
    obs_shape = 16
    action_shape = 8

    key = jax.random.PRNGKey(0)
    kx, kx2, kp = jax.random.split(key, 3)
    w1, b1, w2, b2 = init_params(kp, obs_shape, action_shape)
    p1, p2 = pack_params(w1, b1, w2, b2)

    def ref_forward(x):
        # Pure f32 PyTorch-equivalent math: x -> Linear -> ReLU -> Linear.
        return jnp.maximum(x @ w1 + b1, 0.0) @ w2 + b2

    # --- tiny batch (matches the module's nominal usage scale) ---
    x_small = jax.random.normal(kx, (8, obs_shape), jnp.float32)
    logits_small = jax.block_until_ready(
        discrete_policy_network(x_small, p1, p2, action_shape))
    assert logits_small.shape == (8, action_shape)
    # Tolerance covers possible reduced-precision f32 matmul passes on the MXU.
    assert jnp.allclose(logits_small, ref_forward(x_small), atol=2e-2, rtol=2e-2)

    # --- larger ragged batch: exercises the multi-step grid + padless tail masking ---
    x_big = jax.random.normal(kx2, (1000, obs_shape), jnp.float32)
    logits_big = jax.block_until_ready(
        discrete_policy_network(x_big, p1, p2, action_shape))
    assert logits_big.shape == (1000, action_shape)
    assert jnp.allclose(logits_big, ref_forward(x_big), atol=2e-2, rtol=2e-2)

    print("KERNEL_OK")
</pallas_src>

<mosaic_0001>
module attributes {stable_mosaic.version = 11 : i64} {
  func.func @_policy_kernel(%arg0: i32, %arg1: memref<8x16xf32, #tpu.memory_space<vmem>>, %arg2: memref<17x128xf32, #tpu.memory_space<vmem>>, %arg3: memref<129x128xf32, #tpu.memory_space<vmem>>, %arg4: memref<8x8xf32, #tpu.memory_space<vmem>>) attributes {dimension_semantics = [#tpu.dimension_semantics<parallel>], iteration_bounds = array<i64: 1>, scalar_prefetch = 0 : i64, scratch_operands = 0 : i64, tpu.core_type = #tpu.core_type<tc>, window_params = [{transform_indices = @transform_0, window_bounds = array<i64: 8, 16>}, {pipeline_mode = #tpu.pipeline_mode<synchronous>, transform_indices = @transform_1, window_bounds = array<i64: 17, 128>}, {pipeline_mode = #tpu.pipeline_mode<synchronous>, transform_indices = @transform_2, window_bounds = array<i64: 129, 128>}, {transform_indices = @transform_3, window_bounds = array<i64: 8, 8>}]} {
    %c0 = arith.constant 0 : index
    %c0_0 = arith.constant 0 : index
    %0 = vector.load %arg1[%c0, %c0_0] : memref<8x16xf32, #tpu.memory_space<vmem>>, vector<8x16xf32>
    %c0_1 = arith.constant 0 : index
    %c0_2 = arith.constant 0 : index
    %1 = vector.load %arg2[%c0_1, %c0_2] : memref<17x128xf32, #tpu.memory_space<vmem>>, vector<16x128xf32>
    %c16 = arith.constant 16 : index
    %c0_3 = arith.constant 0 : index
    %2 = vector.load %arg2[%c16, %c0_3] : memref<17x128xf32, #tpu.memory_space<vmem>>, vector<1x128xf32>
    %cst = arith.constant dense<0.000000e+00> : vector<8x128xf32>
    %3 = tpu.matmul %0, %1, %cst {dimension_numbers = #tpu.dot_dimension_numbers<[1], [0], [0], [1], [0, 0, 1, 1], [], []>} : vector<8x16xf32>, vector<16x128xf32>, vector<8x128xf32> -> vector<8x128xf32>
    %4 = vector.broadcast %2 : vector<1x128xf32> to vector<8x128xf32>
    %5 = arith.addf %3, %4 : vector<8x128xf32>
    %cst_4 = arith.constant 0.000000e+00 : f32
    %6 = vector.broadcast %cst_4 : f32 to vector<8x128xf32>
    %7 = arith.maximumf %5, %6 : vector<8x128xf32>
    %c0_5 = arith.constant 0 : index
    %c0_6 = arith.constant 0 : index
    %8 = vector.load %arg3[%c0_5, %c0_6] : memref<129x128xf32, #tpu.memory_space<vmem>>, vector<128x128xf32>
    %c128 = arith.constant 128 : index
    %c0_7 = arith.constant 0 : index
    %9 = vector.load %arg3[%c128, %c0_7] : memref<129x128xf32, #tpu.memory_space<vmem>>, vector<1x128xf32>
    %cst_8 = arith.constant dense<0.000000e+00> : vector<8x128xf32>
    %10 = tpu.matmul %7, %8, %cst_8 {dimension_numbers = #tpu.dot_dimension_numbers<[1], [0], [0], [1], [0, 0, 1, 1], [], []>} : vector<8x128xf32>, vector<128x128xf32>, vector<8x128xf32> -> vector<8x128xf32>
    %11 = vector.broadcast %9 : vector<1x128xf32> to vector<8x128xf32>
    %12 = arith.addf %10, %11 : vector<8x128xf32>
    %13 = vector.extract_strided_slice %12 {offsets = [0, 0], sizes = [8, 8], strides = [1, 1]} : vector<8x128xf32> to vector<8x8xf32>
    %c0_9 = arith.constant 0 : index
    %c0_10 = arith.constant 0 : index
    %14 = vector.load %arg4[%c0_9, %c0_10] : memref<8x8xf32, #tpu.memory_space<vmem>>, vector<8x8xf32>
    tpu.vector_store %arg4[%c0_9, %c0_10], %13 {strides = array<i32>} : memref<8x8xf32, #tpu.memory_space<vmem>>, vector<8x8xf32>,
    return
  }
  func.func @transform_0(%arg0: i32) -> (i32, i32) {
    %c0_i32 = arith.constant 0 : i32
    %c0_i32_0 = arith.constant 0 : i32
    return %arg0, %c0_i32 : i32, i32
  }
  func.func @transform_1(%arg0: i32) -> (i32, i32) {
    %c0_i32 = arith.constant 0 : i32
    %c0_i32_0 = arith.constant 0 : i32
    %c0_i32_1 = arith.constant 0 : i32
    return %c0_i32, %c0_i32_0 : i32, i32
  }
  func.func @transform_2(%arg0: i32) -> (i32, i32) {
    %c0_i32 = arith.constant 0 : i32
    %c0_i32_0 = arith.constant 0 : i32
    %c0_i32_1 = arith.constant 0 : i32
    return %c0_i32, %c0_i32_0 : i32, i32
  }
  func.func @transform_3(%arg0: i32) -> (i32, i32) {
    %c0_i32 = arith.constant 0 : i32
    %c0_i32_0 = arith.constant 0 : i32
    return %arg0, %c0_i32 : i32, i32
  }
}

</mosaic_0001>

<llo_original>
// kernel: tpu_custom_call.1
$region0: #{tpu_custom_call.1}
  #allocation0 [shape = 'u32[]', space=smem, size = 0x4, offset = 0x4, fixed_abs, tag = 'smem constant byte address 0x4 - core index']
  #allocation1 [shape = 'u32[144,128]{1,0:T(1,128)}', space=vmem, size = 0x12000, scoped, tag = 'internal scratch']
  %s0 = inlined_call_operand.hbm [shape: f32[8,16], index: 0, kind: input, shape index: {}]
  %s1 = inlined_call_operand.hbm [shape: f32[17,128], index: 1, kind: input, shape index: {}]
  %s2 = inlined_call_operand.hbm [shape: f32[129,128], index: 2, kind: input, shape index: {}]
  %s3 = inlined_call_operand.hbm [shape: f32[8,8], index: 3, kind: output, shape index: {}]
  %s4 = sld [smem:[#allocation0]]
  $region34: #{tpu_custom_call.1} parent=0
    _
  %s6 = ssub.s32 1, %s4
  %s7 = scalar_select 0, %s6, %s4
  $region1: #{tpu_custom_call.1} parent=0
    #allocation2 [shape = 'u8[4096]{0}', space=vmem, size = 0x1000, scoped, tag = 'input window, operand 0, single buffered']
    #allocation3 [shape = 's32[1]{0}', space=sflag, size = 0x4, scoped, tag = 'scoped memory for tpu_custom_call.1']
    #allocation4 [shape = 's32[1]{0}', space=sflag, size = 0x4, scoped, tag = 'scoped memory for tpu_custom_call.1']
    #allocation5 [shape = 'u8[12288]{0}', space=vmem, size = 0x3000, scoped, tag = 'input window, operand 1, single buffered']
    #allocation6 [shape = 's32[1]{0}', space=sflag, size = 0x4, scoped, tag = 'scoped memory for tpu_custom_call.1']
    #allocation7 [shape = 'u8[69632]{0}', space=vmem, size = 0x11000, scoped, tag = 'input window, operand 2, single buffered']
    #allocation8 [shape = 'u8[4096]{0}', space=vmem, size = 0x1000, scoped, tag = 'output window, operand 0, single buffered']
    %8 = vsyncpa [#allocation3], 0
    %9 = vsyncpa [#allocation6], 0
    %10 = vsyncpa [#allocation4], 0
    // Predicated region
    $region2: #{tpu_custom_call.1} parent=1 // pred_check
      _
    $region3: #{tpu_custom_call.1} parent=1 // pred_check_branch
      %12 = sbr.rel (0) target = $region5
    $region4: #{tpu_custom_call.1} parent=1 // pred_region
      %s14 = ssub.s32 128, 128
      %15 = vsyncadd [#allocation3], %s14
      %s17 = sshll.u32 [#allocation2], 4
      %s18 = int_to_ptr.vmem [resolvable:$true] %s17
      %20 = dma.hbm_to_vmem [thread:$0]  %s0, 128, %s18, [#allocation3]
    $region5: #{tpu_custom_call.1} parent=1 // pred_fallthru
      _
    // Predicated region
    $region6: #{tpu_custom_call.1} parent=1 // pred_check
      _
    $region7: #{tpu_custom_call.1} parent=1 // pred_check_branch
      %22 = sbr.rel (0) target = $region9
    $region8: #{tpu_custom_call.1} parent=1 // pred_region
      %s24 = ssub.s32 384, 384
      %25 = vsyncadd [#allocation6], %s24
      %s26 = sshll.u32 [#allocation5], 4
      %s27 = int_to_ptr.vmem [resolvable:$true] %s26
      %32 = dma.hbm_to_vmem [thread:$0]  %s1, 384, %s27, [#allocation6], 128, 128, 8
    $region9: #{tpu_custom_call.1} parent=1 // pred_fallthru
      _
    // Predicated region
    $region10: #{tpu_custom_call.1} parent=1 // pred_check
      _
    $region11: #{tpu_custom_call.1} parent=1 // pred_check_branch
      %34 = sbr.rel (0) target = $region13
    $region12: #{tpu_custom_call.1} parent=1 // pred_region
      %s36 = ssub.s32 2176, 2176
      %37 = vsyncadd [#allocation6], %s36
      %s38 = sshll.u32 [#allocation7], 4
      %s39 = int_to_ptr.vmem [resolvable:$true] %s38
      %44 = dma.hbm_to_vmem [thread:$0]  %s2, 2176, %s39, [#allocation6], 128, 128, 8
    $region13: #{tpu_custom_call.1} parent=1 // pred_fallthru
      _
    // Predicated region
    $region14: #{tpu_custom_call.1} parent=1 // pred_check
      _
    $region15: #{tpu_custom_call.1} parent=1 // pred_check_branch
      %46 = sbr.rel (0) target = $region17
    $region16: #{tpu_custom_call.1} parent=1 // pred_region
      %47 = dma.done [#allocation3], 128
    $region17: #{tpu_custom_call.1} parent=1 // pred_fallthru
      _
    // Predicated region
    $region18: #{tpu_custom_call.1} parent=1 // pred_check
      _
    $region19: #{tpu_custom_call.1} parent=1 // pred_check_branch
      %49 = sbr.rel (0) target = $region21
    $region20: #{tpu_custom_call.1} parent=1 // pred_region
      %50 = dma.done [#allocation6], 384
    $region21: #{tpu_custom_call.1} parent=1 // pred_fallthru
      _
    // Predicated region
    $region22: #{tpu_custom_call.1} parent=1 // pred_check
      _
    $region23: #{tpu_custom_call.1} parent=1 // pred_check_branch
      %52 = sbr.rel (0) target = $region25
    $region24: #{tpu_custom_call.1} parent=1 // pred_region
      %53 = dma.done [#allocation6], 2176
    $region25: #{tpu_custom_call.1} parent=1 // pred_fallthru
      _
    %v54 = vld [vmem:[#allocation2] sm:$0xff]
    %v55 = vld [vmem:[#allocation5] sm:$0xff]
    %v56 = vld [vmem:[#allocation5 + $0x8] sm:$0xff]
    %v57 = vld [vmem:[#allocation5 + $0x10] sm:$0x1]
    %v58 = vlaneseq
    %v59 = vshrl.u32 %v58, 7
    %v60 = vsub.s32 0, %v59
    %v61 = vrot.slane %v57, %v60
    %vm62 = vcmask 130048
    %v64 = vsel %vm62, %v54, 0
    %66 = vmatprep.subr.mxu0 0.0
    %67 = vmatpush1.msra.mxu0 %v55
    %68 = vmatprep.subr.mxu0 0.0
    %69 = vmatpush1.msra.mxu0 %v56
    %70 = vmatprep.subr.mxu0 0.0
    %71 = vmatpush1.msra.mxu0 0.0
    %72 = vmatprep.subr.mxu0 0.0
    %73 = vmatpush1.msra.mxu0 0.0
    %74 = vmatprep.subr.mxu0 0.0
    %75 = vmatpush1.msra.mxu0 0.0
    %76 = vmatprep.subr.mxu0 0.0
    %77 = vmatpush1.msra.mxu0 0.0
    %78 = vmatprep.subr.mxu0 0.0
    %79 = vmatpush1.msra.mxu0 0.0
    %80 = vmatprep.subr.mxu0 0.0
    %81 = vmatpush1.msra.mxu0 0.0
    %82 = vmatprep.subr.mxu0 0.0
    %83 = vmatpush1.msra.mxu0 0.0
    %84 = vmatprep.subr.mxu0 0.0
    %85 = vmatpush1.msra.mxu0 0.0
    %86 = vmatprep.subr.mxu0 0.0
    %87 = vmatpush1.msra.mxu0 0.0
    %88 = vmatprep.subr.mxu0 0.0
    %89 = vmatpush1.msra.mxu0 0.0
    %90 = vmatprep.subr.mxu0 0.0
    %91 = vmatpush1.msra.mxu0 0.0
    %92 = vmatprep.subr.mxu0 0.0
    %93 = vmatpush1.msra.mxu0 0.0
    %94 = vmatprep.subr.mxu0 0.0
    %95 = vmatpush1.msra.mxu0 0.0
    %96 = vmatprep.subr.mxu0 0.0
    %97 = vmatpush1.msra.mxu0 0.0
    %98 = vmatprep.subr.mxu0 0.0
    %99 = vmatpush1.msra.mxu0 0.0
    %100 = vmatprep.subr.mxu0 0.0
    %101 = vmatpush1.msra.mxu0 0.0
    %102 = vmatprep.subr.mxu0 0.0
    %103 = vmatpush1.msra.mxu0 0.0
    %104 = vmatprep.subr.mxu0 0.0
    %105 = vmatpush1.msra.mxu0 0.0
    %106 = vmatprep.subr.mxu0 0.0
    %107 = vmatpush1.msra.mxu0 0.0
    %108 = vmatprep.subr.mxu0 0.0
    %109 = vmatpush1.msra.mxu0 0.0
    %110 = vmatprep.subr.mxu0 0.0
    %111 = vmatpush1.msra.mxu0 0.0
    %112 = vmatprep.subr.mxu0 0.0
    %113 = vmatpush1.msra.mxu0 0.0
    %114 = vmatprep.subr.mxu0 0.0
    %115 = vmatpush1.msra.mxu0 0.0
    %116 = vmatprep.subr.mxu0 0.0
    %117 = vmatpush1.msra.mxu0 0.0
    %118 = vmatprep.subr.mxu0 0.0
    %119 = vmatpush1.msra.mxu0 0.0
    %120 = vmatprep.subr.mxu0 0.0
    %121 = vmatpush1.msra.mxu0 0.0
    %122 = vmatprep.subr.mxu0 0.0
    %123 = vmatpush1.msra.mxu0 0.0
    %124 = vmatprep.subr.mxu0 0.0
    %125 = vmatpush1.msra.mxu0 0.0
    %126 = vmatprep.subr.mxu0 0.0
    %127 = vmatpush1.msra.mxu0 0.0
    %128 = vmatprep.subr.mxu0 0.0
    %129 = vmatpush1.msra.mxu0 0.0
    %130 = vmatprep.mubr.f32.mxu0 0.0
    %131 = vmatmul.mubr.f32.gmra.mrb[0].mxu0 %v64
    %v132 = vpop.f32.mrb[0].mxu0
    %v133 = vadd.f32 %v61, %v132
    %v134 = vpop.f32.mrb[0].mxu0
    %135 = vdwg.mxu0
    %v136 = vmax.f32 %v133, 0.0
    %v137 = vld [vmem:[#allocation7] sm:$0xff]
    %v138 = vld [vmem:[#allocation7 + $0x8] sm:$0xff]
    %v139 = vld [vmem:[#allocation7 + $0x10] sm:$0xff]
    %v140 = vld [vmem:[#allocation7 + $0x18] sm:$0xff]
    %v141 = vld [vmem:[#allocation7 + $0x20] sm:$0xff]
    %v142 = vld [vmem:[#allocation7 + $0x28] sm:$0xff]
    %v143 = vld [vmem:[#allocation7 + $0x30] sm:$0xff]
    %v144 = vld [vmem:[#allocation7 + $0x38] sm:$0xff]
    %v145 = vld [vmem:[#allocation7 + $0x40] sm:$0xff]
    %v146 = vld [vmem:[#allocation7 + $0x48] sm:$0xff]
    %v147 = vld [vmem:[#allocation7 + $0x50] sm:$0xff]
    %v148 = vld [vmem:[#allocation7 + $0x58] sm:$0xff]
    %v149 = vld [vmem:[#allocation7 + $0x60] sm:$0xff]
    %v150 = vld [vmem:[#allocation7 + $0x68] sm:$0xff]
    %v151 = vld [vmem:[#allocation7 + $0x70] sm:$0xff]
    %v152 = vld [vmem:[#allocation7 + $0x78] sm:$0xff]
    %v153 = vld [vmem:[#allocation7 + $0x80] sm:$0x1]
    %v154 = vlaneseq
    %v155 = vshrl.u32 %v154, 7
    %v156 = vsub.s32 0, %v155
    %v157 = vrot.slane %v153, %v156
    %158 = vmatprep.subr.mxu0 0.0
    %159 = vmatpush1.msra.mxu0 %v137
    %160 = vmatprep.subr.mxu0 0.0
    %161 = vmatpush1.msra.mxu0 %v138
    %162 = vmatprep.subr.mxu0 0.0
    %163 = vmatpush1.msra.mxu0 %v139
    %164 = vmatprep.subr.mxu0 0.0
    %165 = vmatpush1.msra.mxu0 %v140
    %166 = vmatprep.subr.mxu0 0.0
    %167 = vmatpush1.msra.mxu0 %v141
    %168 = vmatprep.subr.mxu0 0.0
    %169 = vmatpush1.msra.mxu0 %v142
    %170 = vmatprep.subr.mxu0 0.0
    %171 = vmatpush1.msra.mxu0 %v143
    %172 = vmatprep.subr.mxu0 0.0
    %173 = vmatpush1.msra.mxu0 %v144
    %174 = vmatprep.subr.mxu0 0.0
    %175 = vmatpush1.msra.mxu0 %v145
    %176 = vmatprep.subr.mxu0 0.0
    %177 = vmatpush1.msra.mxu0 %v146
    %178 = vmatprep.subr.mxu0 0.0
    %179 = vmatpush1.msra.mxu0 %v147
    %180 = vmatprep.subr.mxu0 0.0
    %181 = vmatpush1.msra.mxu0 %v148
    %182 = vmatprep.subr.mxu0 0.0
    %183 = vmatpush1.msra.mxu0 %v149
    %184 = vmatprep.subr.mxu0 0.0
    %185 = vmatpush1.msra.mxu0 %v150
    %186 = vmatprep.subr.mxu0 0.0
    %187 = vmatpush1.msra.mxu0 %v151
    %188 = vmatprep.subr.mxu0 0.0
    %189 = vmatpush1.msra.mxu0 %v152
    %190 = vmatprep.subr.mxu0 0.0
    %191 = vmatpush1.msra.mxu0 0.0
    %192 = vmatprep.subr.mxu0 0.0
    %193 = vmatpush1.msra.mxu0 0.0
    %194 = vmatprep.subr.mxu0 0.0
    %195 = vmatpush1.msra.mxu0 0.0
    %196 = vmatprep.subr.mxu0 0.0
    %197 = vmatpush1.msra.mxu0 0.0
    %198 = vmatprep.subr.mxu0 0.0
    %199 = vmatpush1.msra.mxu0 0.0
    %200 = vmatprep.subr.mxu0 0.0
    %201 = vmatpush1.msra.mxu0 0.0
    %202 = vmatprep.subr.mxu0 0.0
    %203 = vmatpush1.msra.mxu0 0.0
    %204 = vmatprep.subr.mxu0 0.0
    %205 = vmatpush1.msra.mxu0 0.0
    %206 = vmatprep.subr.mxu0 0.0
    %207 = vmatpush1.msra.mxu0 0.0
    %208 = vmatprep.subr.mxu0 0.0
    %209 = vmatpush1.msra.mxu0 0.0
    %210 = vmatprep.subr.mxu0 0.0
    %211 = vmatpush1.msra.mxu0 0.0
    %212 = vmatprep.subr.mxu0 0.0
    %213 = vmatpush1.msra.mxu0 0.0
    %214 = vmatprep.subr.mxu0 0.0
    %215 = vmatpush1.msra.mxu0 0.0
    %216 = vmatprep.subr.mxu0 0.0
    %217 = vmatpush1.msra.mxu0 0.0
    %218 = vmatprep.subr.mxu0 0.0
    %219 = vmatpush1.msra.mxu0 0.0
    %220 = vmatprep.subr.mxu0 0.0
    %221 = vmatpush1.msra.mxu0 0.0
    %222 = vmatprep.mubr.f32.mxu0 0.0
    %223 = vmatmul.mubr.f32.gmra.mrb[0].mxu0 %v136
    %v224 = vpop.f32.mrb[0].mxu0
    %v225 = vadd.f32 %v157, %v224
    %v226 = vpop.f32.mrb[0].mxu0
    %227 = vdwg.mxu0
    %vm228 = vcmask 64512
    %229 = vst.msk [vmem:[#allocation8] sm:$0xff] %vm228, %v225
    // Predicated region
    $region26: #{tpu_custom_call.1} parent=1 // pred_check
      _
    $region27: #{tpu_custom_call.1} parent=1 // pred_check_branch
      %231 = sbr.rel (0) target = $region29
    $region28: #{tpu_custom_call.1} parent=1 // pred_region
      %s233 = ssub.s32 128, 128
      %234 = vsyncadd [#allocation4], %s233
      %s236 = sshll.u32 [#allocation8], 4
      %s237 = int_to_ptr.vmem [resolvable:$true] %s236
      %239 = dma.vmem_to_hbm [thread:$0]  %s237, 128, %s3, [#allocation4]
    $region29: #{tpu_custom_call.1} parent=1 // pred_fallthru
      _
    // Predicated region
    $region30: #{tpu_custom_call.1} parent=1 // pred_check
      _
    $region31: #{tpu_custom_call.1} parent=1 // pred_check_branch
      %241 = sbr.rel (0) target = $region33
    $region32: #{tpu_custom_call.1} parent=1 // pred_region
      %242 = dma.done [#allocation4], 128
    $region33: #{tpu_custom_call.1} parent=1 // pred_fallthru
      _
    %243 = vsyncpa [#allocation3], 1
    %244 = vsyncpa [#allocation6], 1
    %245 = vsyncpa [#allocation4], 1

</llo_original>
